<compile_context>
chip_gen: v5e
topology: v5e:2x2
jax: 0.10.0
libtpu: 0.0.40
codegen_flags: <defaults>
</compile_context>

<pallas_src>
import jax
import jax.numpy as jnp
import numpy as np
from jax import lax
from jax.experimental import pallas as pl
from jax.experimental.pallas import tpu as pltpu


def _round_up(x, m):
    return (x + m - 1) // m * m


def make_temporal_block_kernel(Bt, L, p, d, k, Tp, c_in_p, c_out_p):
    """Per-batch-tile TemporalBlock kernel (all sizes static)."""
    M1 = Bt * Tp - p   # conv1 extended-output rows (segments at stride Tp)
    M2 = M1 - p        # conv2 / residual / final-output rows

    def kernel(x_ref, w1c_ref, b1c_ref, w2_ref, b2_ref, out_ref):
        # x_ref   : (Bt*Tp, c_in_p)         bf16  flat batch tile (see header)
        # w1c_ref : (k*c_in_p, 2*c_out_p)   bf16  [conv1 taps | 1x1 downsample
        #                                          in the last-tap row block]
        # b1c_ref : (1, 2*c_out_p)          f32   [b1 | bd]
        # w2_ref  : (k*c_out_p, c_out_p)    bf16
        # b2_ref  : (1, c_out_p)            f32
        # out_ref : (Bt, L, c_out_p)        bf16
        x = x_ref[...]

        # ---- conv1 (dilated causal) fused with the 1x1 downsample ----------
        # Taps folded into the contraction dim; batch folded into M.
        x_taps = jnp.concatenate(
            [x[j * d:j * d + M1, :] for j in range(k)], axis=-1)
        acc1 = jnp.dot(x_taps, w1c_ref[...],
                       preferred_element_type=jnp.float32)      # (M1, 2*c_out_p)
        acc1 = acc1 + b1c_ref[...]

        # Causal-pad mask: the first p rows of every Tp-row segment are
        # "virtual" (t < 0) conv1 outputs and must read as exact zeros for
        # conv2 (they reproduce h1's causal zero left-pad).  Built as a
        # narrow (rows, 1) column; the where() broadcasts over lanes.
        seg_rows = lax.broadcasted_iota(jnp.int32, (Tp, 1), 0)
        seg_mask = seg_rows < p                                  # (Tp, 1)
        if Bt > 1:
            mask = jnp.concatenate([seg_mask] * Bt, axis=0)[:M1]
        else:
            mask = seg_mask[:M1]

        # conv1 + chomp + bias + ReLU   (dropout1 = identity at inference)
        h1 = jnp.maximum(acc1[:, :c_out_p], 0.0)
        h1 = jnp.where(mask, 0.0, h1).astype(jnp.bfloat16)       # (M1, c_out_p)

        # 1x1 downsample residual (bias already added via b1c); for batch i,
        # time t it sits at row i*Tp + p + t of the fused extra columns.
        res = acc1[p:p + M2, c_out_p:]                           # (M2, c_out_p)

        # ---- conv2 (dilated causal) + chomp + bias + ReLU -------------------
        h_taps = jnp.concatenate(
            [h1[j * d:j * d + M2, :] for j in range(k)], axis=-1)
        acc2 = jnp.dot(h_taps, w2_ref[...],
                       preferred_element_type=jnp.float32)       # (M2, c_out_p)
        h2 = jnp.maximum(acc2 + b2_ref[...], 0.0)
        # dropout2 = identity at inference

        # ---- residual add + final ReLU, store (bf16, lane-dense) -----------
        y = jnp.maximum(h2 + res, 0.0).astype(out_ref.dtype)     # (M2, c_out_p)
        for i in range(Bt):   # stores only; slices are 8-aligned (i*Tp % 8 == 0)
            out_ref[i] = y[i * Tp:i * Tp + L, :]

    return kernel


def temporal_block_forward(x, w1, b1, w2, b2, wd, bd, *,
                           kernel_size, dilation, padding):
    """x: (B, C_in, L) f32; conv weights in PyTorch layout (C_out, C_in, k)."""
    B, c_in, L = x.shape
    c_out = w1.shape[0]
    k, d, p = kernel_size, dilation, padding
    # The residual add only type-checks when the chomped conv preserves length.
    assert p == d * (k - 1), "padding must equal dilation*(kernel_size-1)"

    c_in_p = _round_up(c_in, 128)
    c_out_p = _round_up(c_out, 128)
    T = L + 2 * p                 # per-segment padded input length
    Tp = _round_up(T, 8)          # sublane-aligned segment stride

    # ---- batch tile selection: VMEM budget + >=2 grid steps (v7x 2 TCs) ----
    in_row = Tp * c_in_p * 2                         # bf16 input block / batch
    out_row = L * c_out_p * 2                        # bf16 output block / batch
    w_bytes = (k * c_in_p * 2 * c_out_p + k * c_out_p * c_out_p) * 2 \
        + (2 * c_out_p + c_out_p) * 4
    inter_row = Tp * (k * c_in_p * 2 + 2 * c_out_p * 4
                      + k * c_out_p * 2 + 2 * c_out_p * 4)       # intermediates
    budget = 20 * 1024 * 1024
    Bt = 1
    for cand in range(1, B + 1):
        if B % cand:
            continue
        if B >= 2 and B // cand < 2:     # keep >= 2 parallel steps for v7x
            continue
        need = 2 * w_bytes + cand * (2 * in_row + 2 * out_row + inter_row)
        if need <= budget:
            Bt = cand

    # ---- host-side layout plumbing ----
    # NCL -> NLC, lane-pad channels, per-segment [2p zeros | data | tail], flatten.
    x_nlc = jnp.transpose(x, (0, 2, 1)).astype(jnp.float32)
    x_nlc = jnp.pad(x_nlc, ((0, 0), (2 * p, Tp - T), (0, c_in_p - c_in)))
    x_flat = x_nlc.reshape(B * Tp, c_in_p).astype(jnp.bfloat16)

    def tapize(w, cin, cin_p):
        # (c_out, cin, k) -> (k, cin, c_out) -> pad -> (k*cin_p, c_out_p)
        wk = jnp.transpose(w, (2, 1, 0)).astype(jnp.float32)
        wk = jnp.pad(wk, ((0, 0), (0, cin_p - cin), (0, c_out_p - c_out)))
        return wk.reshape(k * cin_p, c_out_p)

    w1_t = tapize(w1, c_in, c_in_p)                          # (k*c_in_p, c_out_p)
    w2_t = tapize(w2, c_out, c_out_p).astype(jnp.bfloat16)   # (k*c_out_p, c_out_p)

    # 1x1 downsample fused into conv1: extra output columns whose weights live
    # only in the LAST tap's row block (last tap reads x[2p + t] at the rows
    # we extract the residual from).
    wd_p = jnp.pad(jnp.transpose(wd[:, :, 0], (1, 0)).astype(jnp.float32),
                   ((0, c_in_p - c_in), (0, c_out_p - c_out)))
    wd_full = jnp.zeros((k * c_in_p, c_out_p), jnp.float32)
    wd_full = wd_full.at[(k - 1) * c_in_p:, :].set(wd_p)
    w1c = jnp.concatenate([w1_t, wd_full], axis=1).astype(jnp.bfloat16)

    def pad_bias(b):
        return jnp.pad(b.astype(jnp.float32),
                       (0, c_out_p - c_out)).reshape(1, c_out_p)

    b1c = jnp.concatenate([pad_bias(b1), pad_bias(bd)], axis=1)  # (1, 2*c_out_p)
    b2_k = pad_bias(b2)

    kern = make_temporal_block_kernel(Bt, L, p, d, k, Tp, c_in_p, c_out_p)
    M_in = Bt * Tp

    out_padded = pl.pallas_call(
        kern,
        out_shape=jax.ShapeDtypeStruct((B, L, c_out_p), jnp.bfloat16),
        grid_spec=pltpu.PrefetchScalarGridSpec(
            num_scalar_prefetch=0,
            grid=(B // Bt,),
            in_specs=[
                pl.BlockSpec((M_in, c_in_p), lambda b: (b, 0)),
                pl.BlockSpec((k * c_in_p, 2 * c_out_p), lambda b: (0, 0)),
                pl.BlockSpec((1, 2 * c_out_p), lambda b: (0, 0)),
                pl.BlockSpec((k * c_out_p, c_out_p), lambda b: (0, 0)),
                pl.BlockSpec((1, c_out_p), lambda b: (0, 0)),
            ],
            out_specs=pl.BlockSpec((Bt, L, c_out_p), lambda b: (b, 0, 0)),
        ),
        compiler_params=pltpu.CompilerParams(
            dimension_semantics=("parallel",),
            vmem_limit_bytes=48 * 1024 * 1024),
    )(x_flat, w1c, b1c, w2_t, b2_k)

    # Slice padded channels, cast back to f32, NLC -> NCL.
    return jnp.transpose(out_padded[:, :, :c_out].astype(jnp.float32),
                         (0, 2, 1))


# ---------------- pure-JAX reference (PyTorch conv semantics) ----------------
def _conv1d_pt(x, w, b, pad, dil):
    y = jax.lax.conv_general_dilated(
        x, w, window_strides=(1,), padding=[(pad, pad)],
        rhs_dilation=(dil,), dimension_numbers=("NCH", "OIH", "NCH"))
    return y + b[None, :, None]


def temporal_block_ref(x, w1, b1, w2, b2, wd, bd, *, dilation, padding):
    p, d = padding, dilation
    h1 = jax.nn.relu(_conv1d_pt(x, w1, b1, p, d)[:, :, :-p])   # conv1+chomp+relu
    h2 = jax.nn.relu(_conv1d_pt(h1, w2, b2, p, d)[:, :, :-p])  # conv2+chomp+relu
    res = _conv1d_pt(x, wd, bd, 0, 1)                          # 1x1 downsample
    return jax.nn.relu(h2 + res)


if __name__ == "__main__":
    # Small shapes consistent with the module (n_inputs != n_outputs so the
    # downsample path is exercised).  kernel_size=2, dilation=3, padding=3
    # matches the module's default padding=3 while keeping the residual add
    # well-formed (padding == dilation * (kernel_size - 1)).
    B, C_IN, C_OUT, L = 2, 16, 8, 16
    K, DIL, PAD = 2, 3, 3

    key = jax.random.PRNGKey(0)
    (kv1, kg1, kb1, kv2, kg2, kb2, kwd, kbd, kx) = jax.random.split(key, 9)

    # weight_norm(conv): effective W = g * v / ||v|| (norm over (C_in, k) per
    # out-channel), folded into the effective weights passed to the kernel.
    v1 = 0.01 * jax.random.normal(kv1, (C_OUT, C_IN, K), jnp.float32)
    g1 = 1.0 + 0.1 * jax.random.normal(kg1, (C_OUT, 1, 1), jnp.float32)
    w1 = g1 * v1 / jnp.sqrt(jnp.sum(v1 ** 2, axis=(1, 2), keepdims=True))
    b1 = 0.01 * jax.random.normal(kb1, (C_OUT,), jnp.float32)

    v2 = 0.01 * jax.random.normal(kv2, (C_OUT, C_OUT, K), jnp.float32)
    g2 = 1.0 + 0.1 * jax.random.normal(kg2, (C_OUT, 1, 1), jnp.float32)
    w2 = g2 * v2 / jnp.sqrt(jnp.sum(v2 ** 2, axis=(1, 2), keepdims=True))
    b2 = 0.01 * jax.random.normal(kb2, (C_OUT,), jnp.float32)

    wd = 0.01 * jax.random.normal(kwd, (C_OUT, C_IN, 1), jnp.float32)
    bd = 0.01 * jax.random.normal(kbd, (C_OUT,), jnp.float32)

    x = jax.random.normal(kx, (B, C_IN, L), jnp.float32)

    out = temporal_block_forward(
        x, w1, b1, w2, b2, wd, bd,
        kernel_size=K, dilation=DIL, padding=PAD)
    out = jax.block_until_ready(out)

    ref = temporal_block_ref(x, w1, b1, w2, b2, wd, bd,
                             dilation=DIL, padding=PAD)
    # bf16 matmul operands / bf16 output with f32 accumulation -> relaxed tol.
    np.testing.assert_allclose(np.asarray(out), np.asarray(ref),
                               rtol=5e-2, atol=5e-2)

    print("KERNEL_OK")
</pallas_src>

<mosaic_0001>
module attributes {stable_mosaic.version = 11 : i64} {
  func.func @kernel(%arg0: i32, %arg1: memref<24x128xbf16, #tpu.memory_space<vmem>>, %arg2: memref<256x256xbf16, #tpu.memory_space<vmem>>, %arg3: memref<1x256xf32, #tpu.memory_space<vmem>>, %arg4: memref<256x128xbf16, #tpu.memory_space<vmem>>, %arg5: memref<1x128xf32, #tpu.memory_space<vmem>>, %arg6: memref<1x16x128xbf16, #tpu.memory_space<vmem>>) attributes {dimension_semantics = [#tpu.dimension_semantics<parallel>], iteration_bounds = array<i64: 2>, scalar_prefetch = 0 : i64, scratch_operands = 0 : i64, tpu.core_type = #tpu.core_type<tc>, window_params = [{transform_indices = @transform_0, window_bounds = array<i64: 24, 128>}, {pipeline_mode = #tpu.pipeline_mode<synchronous>, transform_indices = @transform_1, window_bounds = array<i64: 256, 256>}, {pipeline_mode = #tpu.pipeline_mode<synchronous>, transform_indices = @transform_2, window_bounds = array<i64: 1, 256>}, {pipeline_mode = #tpu.pipeline_mode<synchronous>, transform_indices = @transform_3, window_bounds = array<i64: 256, 128>}, {pipeline_mode = #tpu.pipeline_mode<synchronous>, transform_indices = @transform_4, window_bounds = array<i64: 1, 128>}, {transform_indices = @transform_5, window_bounds = array<i64: 1, 16, 128>}]} {
    %c0 = arith.constant 0 : index
    %c0_0 = arith.constant 0 : index
    %0 = vector.load %arg1[%c0, %c0_0] : memref<24x128xbf16, #tpu.memory_space<vmem>>, vector<24x128xbf16>
    %1 = vector.extract_strided_slice %0 {offsets = [0, 0], sizes = [21, 128], strides = [1, 1]} : vector<24x128xbf16> to vector<21x128xbf16>
    %2 = vector.extract_strided_slice %0 {offsets = [3, 0], sizes = [21, 128], strides = [1, 1]} : vector<24x128xbf16> to vector<21x128xbf16>
    %3 = tpu.concatenate %1, %2 in 1 : vector<21x128xbf16>, vector<21x128xbf16> -> vector<21x256xbf16>
    %c0_1 = arith.constant 0 : index
    %c0_2 = arith.constant 0 : index
    %4 = vector.load %arg2[%c0_1, %c0_2] : memref<256x256xbf16, #tpu.memory_space<vmem>>, vector<256x256xbf16>
    %cst = arith.constant dense<0.000000e+00> : vector<21x256xf32>
    %5 = tpu.matmul %3, %4, %cst {dimension_numbers = #tpu.dot_dimension_numbers<[1], [0], [0], [1], [0, 0, 1, 1], [], []>} : vector<21x256xbf16>, vector<256x256xbf16>, vector<21x256xf32> -> vector<21x256xf32>
    %c0_3 = arith.constant 0 : index
    %c0_4 = arith.constant 0 : index
    %6 = vector.load %arg3[%c0_3, %c0_4] : memref<1x256xf32, #tpu.memory_space<vmem>>, vector<1x256xf32>
    %7 = vector.broadcast %6 : vector<1x256xf32> to vector<21x256xf32>
    %8 = arith.addf %5, %7 : vector<21x256xf32>
    %9 = tpu.iota {dimensions = array<i32: 0>} : vector<24x1xi32>
    %c3_i32 = arith.constant 3 : i32
    %10 = vector.broadcast %c3_i32 : i32 to vector<24x1xi32>
    %11 = arith.cmpi slt, %9, %10 : vector<24x1xi32>
    %12 = vector.extract_strided_slice %11 {offsets = [0, 0], sizes = [21, 1], strides = [1, 1]} : vector<24x1xi1> to vector<21x1xi1>
    %13 = vector.extract_strided_slice %8 {offsets = [0, 0], sizes = [21, 128], strides = [1, 1]} : vector<21x256xf32> to vector<21x128xf32>
    %cst_5 = arith.constant 0.000000e+00 : f32
    %14 = vector.broadcast %cst_5 : f32 to vector<21x128xf32>
    %15 = arith.maximumf %13, %14 : vector<21x128xf32>
    %cst_6 = arith.constant 0.000000e+00 : f32
    %16 = vector.shape_cast %12 : vector<21x1xi1> to vector<21x1xi1>
    %17 = vector.broadcast %16 : vector<21x1xi1> to vector<21x128xi1>
    %18 = vector.broadcast %cst_6 : f32 to vector<21x128xf32>
    %19 = arith.select %17, %18, %15 : vector<21x128xi1>, vector<21x128xf32>
    %20 = arith.truncf %19 : vector<21x128xf32> to vector<21x128xbf16>
    %21 = vector.extract_strided_slice %8 {offsets = [3, 128], sizes = [18, 128], strides = [1, 1]} : vector<21x256xf32> to vector<18x128xf32>
    %22 = vector.extract_strided_slice %20 {offsets = [0, 0], sizes = [18, 128], strides = [1, 1]} : vector<21x128xbf16> to vector<18x128xbf16>
    %23 = vector.extract_strided_slice %20 {offsets = [3, 0], sizes = [18, 128], strides = [1, 1]} : vector<21x128xbf16> to vector<18x128xbf16>
    %24 = tpu.concatenate %22, %23 in 1 : vector<18x128xbf16>, vector<18x128xbf16> -> vector<18x256xbf16>
    %c0_7 = arith.constant 0 : index
    %c0_8 = arith.constant 0 : index
    %25 = vector.load %arg4[%c0_7, %c0_8] : memref<256x128xbf16, #tpu.memory_space<vmem>>, vector<256x128xbf16>
    %cst_9 = arith.constant dense<0.000000e+00> : vector<18x128xf32>
    %26 = tpu.matmul %24, %25, %cst_9 {dimension_numbers = #tpu.dot_dimension_numbers<[1], [0], [0], [1], [0, 0, 1, 1], [], []>} : vector<18x256xbf16>, vector<256x128xbf16>, vector<18x128xf32> -> vector<18x128xf32>
    %c0_10 = arith.constant 0 : index
    %c0_11 = arith.constant 0 : index
    %27 = vector.load %arg5[%c0_10, %c0_11] : memref<1x128xf32, #tpu.memory_space<vmem>>, vector<1x128xf32>
    %28 = vector.broadcast %27 : vector<1x128xf32> to vector<18x128xf32>
    %29 = arith.addf %26, %28 : vector<18x128xf32>
    %cst_12 = arith.constant 0.000000e+00 : f32
    %30 = vector.broadcast %cst_12 : f32 to vector<18x128xf32>
    %31 = arith.maximumf %29, %30 : vector<18x128xf32>
    %32 = arith.addf %31, %21 : vector<18x128xf32>
    %cst_13 = arith.constant 0.000000e+00 : f32
    %33 = vector.broadcast %cst_13 : f32 to vector<18x128xf32>
    %34 = arith.maximumf %32, %33 : vector<18x128xf32>
    %35 = arith.truncf %34 : vector<18x128xf32> to vector<18x128xbf16>
    %36 = vector.extract_strided_slice %35 {offsets = [0, 0], sizes = [16, 128], strides = [1, 1]} : vector<18x128xbf16> to vector<16x128xbf16>
    %c0_14 = arith.constant 0 : index
    %c0_15 = arith.constant 0 : index
    %c0_16 = arith.constant 0 : index
    %37 = vector.load %arg6[%c0_14, %c0_15, %c0_16] : memref<1x16x128xbf16, #tpu.memory_space<vmem>>, vector<1x16x128xbf16>
    %38 = vector.shape_cast %37 : vector<1x16x128xbf16> to vector<16x128xbf16>
    %39 = vector.shape_cast %36 : vector<16x128xbf16> to vector<1x16x128xbf16>
    tpu.vector_store %arg6[%c0_14, %c0_15, %c0_16], %39 {strides = array<i32>} : memref<1x16x128xbf16, #tpu.memory_space<vmem>>, vector<1x16x128xbf16>,
    return
  }
  func.func @transform_0(%arg0: i32) -> (i32, i32) {
    %c0_i32 = arith.constant 0 : i32
    %c0_i32_0 = arith.constant 0 : i32
    return %arg0, %c0_i32 : i32, i32
  }
  func.func @transform_1(%arg0: i32) -> (i32, i32) {
    %c0_i32 = arith.constant 0 : i32
    %c0_i32_0 = arith.constant 0 : i32
    %c0_i32_1 = arith.constant 0 : i32
    return %c0_i32, %c0_i32_0 : i32, i32
  }
  func.func @transform_2(%arg0: i32) -> (i32, i32) {
    %c0_i32 = arith.constant 0 : i32
    %c0_i32_0 = arith.constant 0 : i32
    %c0_i32_1 = arith.constant 0 : i32
    return %c0_i32, %c0_i32_0 : i32, i32
  }
  func.func @transform_3(%arg0: i32) -> (i32, i32) {
    %c0_i32 = arith.constant 0 : i32
    %c0_i32_0 = arith.constant 0 : i32
    %c0_i32_1 = arith.constant 0 : i32
    return %c0_i32, %c0_i32_0 : i32, i32
  }
  func.func @transform_4(%arg0: i32) -> (i32, i32) {
    %c0_i32 = arith.constant 0 : i32
    %c0_i32_0 = arith.constant 0 : i32
    %c0_i32_1 = arith.constant 0 : i32
    return %c0_i32, %c0_i32_0 : i32, i32
  }
  func.func @transform_5(%arg0: i32) -> (i32, i32, i32) {
    %c0_i32 = arith.constant 0 : i32
    %c0_i32_0 = arith.constant 0 : i32
    %c0_i32_1 = arith.constant 0 : i32
    return %arg0, %c0_i32, %c0_i32_0 : i32, i32, i32
  }
}

</mosaic_0001>

<llo_original>
// kernel: tpu_custom_call.1
$region0: #{tpu_custom_call.1}
  #allocation0 [shape = 'u32[]', space=smem, size = 0x4, offset = 0x4, fixed_abs, tag = 'smem constant byte address 0x4 - core index']
  #allocation1 [shape = 'u32[72,128]{1,0:T(1,128)}', space=vmem, size = 0x9000, scoped, tag = 'internal scratch']
  %s0 = inlined_call_operand.hbm [shape: bf16[48,128], index: 0, kind: input, shape index: {}]
  %s1 = inlined_call_operand.hbm [shape: bf16[256,256], index: 1, kind: input, shape index: {}]
  %s2 = inlined_call_operand.hbm [shape: f32[1,256], index: 2, kind: input, shape index: {}]
  %s3 = inlined_call_operand.hbm [shape: bf16[256,128], index: 3, kind: input, shape index: {}]
  %s4 = inlined_call_operand.vmem [shape: f32[1,128], index: 4, kind: input, shape index: {}]
  %s5 = inlined_call_operand.hbm [shape: bf16[2,16,128], index: 5, kind: output, shape index: {}]
  %s6 = sld [smem:[#allocation0]]
  $region69: #{tpu_custom_call.1} parent=0
    _
  %s8 = ssub.s32 1, %s6
  %s9 = scalar_select 0, %s8, %s6
  $region1: #{tpu_custom_call.1} parent=0
    #allocation2 [shape = 'u8[12288]{0}', space=vmem, size = 0x3000, scoped, tag = 'input window, operand 0']
    #allocation3 [shape = 's32[2]{0}', space=sflag, size = 0x8, scoped, tag = 'scoped memory for tpu_custom_call.1']
    #allocation4 [shape = 's32[2]{0}', space=sflag, size = 0x8, scoped, tag = 'scoped memory for tpu_custom_call.1']
    #allocation5 [shape = 'u8[131072]{0}', space=vmem, size = 0x20000, scoped, tag = 'input window, operand 1, single buffered']
    #allocation6 [shape = 's32[1]{0}', space=sflag, size = 0x4, scoped, tag = 'scoped memory for tpu_custom_call.1']
    #allocation7 [shape = 'u8[1024]{0}', space=vmem, size = 0x400, scoped, tag = 'input window, operand 2, single buffered']
    #allocation8 [shape = 'u8[65536]{0}', space=vmem, size = 0x10000, scoped, tag = 'input window, operand 3, single buffered']
    #allocation9 [shape = 's32[1]{0}', space=sflag, size = 0x4, scoped, tag = 'scoped memory for tpu_custom_call.1']
    #allocation10 [shape = 'u8[8192]{0}', space=vmem, size = 0x2000, scoped, tag = 'output window, operand 0']
    %10 = vsyncpa [#allocation3], 0
    %s11 = scalar_lea.sflag [#allocation3], 1
    %12 = vsyncpa %s11, 0
    %13 = vsyncpa [#allocation6], 0
    %14 = vsyncpa [#allocation9], 0
    %15 = vsyncpa [#allocation4], 0
    %s16 = scalar_lea.sflag [#allocation4], 1
    %17 = vsyncpa %s16, 0
    loop: start=0, step=1, limit=4
    $region2: #{tpu_custom_call.1} parent=1 // loop_pre_header
      _
    $region3: #{tpu_custom_call.1} parent=1 // loop_header
      %s19 = sphi 0, %s23
      %p20 = scmp.ge.s32.totalorder %s19, 4
      %s29 = sphi 0, %s31
      %s32 = sphi 0, %s29
      %s33 = sphi 0, %s32
      %s49 = sphi 0, %s33
      %s53 = sphi 0, %s53
      %s55 = sphi 0, %s53
      %s56 = sphi 0, %s55
      %s70 = sphi 0, %s56
      %s74 = sphi 0, %s74
      %s76 = sphi 0, %s74
      %s77 = sphi 0, %s76
      %s91 = sphi 0, %s77
      %s95 = sphi 0, %s95
      %s97 = sphi 0, %s95
      %s98 = sphi 0, %s97
      %s112 = sphi 0, %s98
      %s116 = sphi 0, %s116
      %s118 = sphi 0, %s116
      %s119 = sphi 0, %s118
      %s133 = sphi 0, %s119
      %s139 = sphi 0, %s141
      %s142 = sphi 0, %s139
      %s143 = sphi 0, %s142
      %s159 = sphi 0, %s143
    $region4: #{tpu_custom_call.1} parent=1 // loop_header_branch
      %22 = sbr.rel (%p20) target = $region8
    $region5: #{tpu_custom_call.1} parent=1 // loop_body
      %s24 = ssub.s32 %s19, 1
      %s25 = ssub.s32 %s19, 2
      %s26 = sadd.s32 %s19, 1
      %s27 = ssub.s32 %s19, %s26
      %p28 = scmp.eq.s32.totalorder %s27, 0
      %s30 = sadd.s32 %s29, 1
      %s31 = scalar_select %p28, %s29, %s30
      %p34 = pneg %p28
      %p35 = scmp.eq.s32.totalorder %s19, 1
      %p36 = por %p34, %p35
      %p37 = scmp.ne.s32.totalorder %s29, %s32
      %p38 = scmp.eq.s32.totalorder %s19, 0
      %p39 = por %p37, %p38
      %p40 = scmp.ne.s32.totalorder %s29, %s32
      %p41 = scmp.eq.s32.totalorder %s24, 1
      %p42 = por %p40, %p41
      %p43 = scmp.ne.s32.totalorder %s32, %s33
      %p44 = scmp.eq.s32.totalorder %s24, 0
      %p45 = por %p43, %p44
      %p46 = scmp.ne.s32.totalorder %s32, %s33
      %p47 = scmp.eq.s32.totalorder %s25, 1
      %p48 = por %p46, %p47
      %p50 = scmp.ne.s32.totalorder %s33, %s49
      %p51 = scmp.eq.s32.totalorder %s25, 0
      %p52 = por %p50, %p51
      %s54 = sadd.s32 %s53, 1
      %p57 = scmp.eq.s32.totalorder %s19, 1
      %p58 = scmp.ne.s32.totalorder %s53, %s55
      %p59 = scmp.eq.s32.totalorder %s19, 0
      %p60 = por %p58, %p59
      %p61 = scmp.ne.s32.totalorder %s53, %s55
      %p62 = scmp.eq.s32.totalorder %s24, 1
      %p63 = por %p61, %p62
      %p64 = scmp.ne.s32.totalorder %s55, %s56
      %p65 = scmp.eq.s32.totalorder %s24, 0
      %p66 = por %p64, %p65
      %p67 = scmp.ne.s32.totalorder %s55, %s56
      %p68 = scmp.eq.s32.totalorder %s25, 1
      %p69 = por %p67, %p68
      %p71 = scmp.ne.s32.totalorder %s56, %s70
      %p72 = scmp.eq.s32.totalorder %s25, 0
      %p73 = por %p71, %p72
      %s75 = sadd.s32 %s74, 1
      %p78 = scmp.eq.s32.totalorder %s19, 1
      %p79 = scmp.ne.s32.totalorder %s74, %s76
      %p80 = scmp.eq.s32.totalorder %s19, 0
      %p81 = por %p79, %p80
      %p82 = scmp.ne.s32.totalorder %s74, %s76
      %p83 = scmp.eq.s32.totalorder %s24, 1
      %p84 = por %p82, %p83
      %p85 = scmp.ne.s32.totalorder %s76, %s77
      %p86 = scmp.eq.s32.totalorder %s24, 0
      %p87 = por %p85, %p86
      %p88 = scmp.ne.s32.totalorder %s76, %s77
      %p89 = scmp.eq.s32.totalorder %s25, 1
      %p90 = por %p88, %p89
      %p92 = scmp.ne.s32.totalorder %s77, %s91
      %p93 = scmp.eq.s32.totalorder %s25, 0
      %p94 = por %p92, %p93
      %s96 = sadd.s32 %s95, 1
      %p99 = scmp.eq.s32.totalorder %s19, 1
      %p100 = scmp.ne.s32.totalorder %s95, %s97
      %p101 = scmp.eq.s32.totalorder %s19, 0
      %p102 = por %p100, %p101
      %p103 = scmp.ne.s32.totalorder %s95, %s97
      %p104 = scmp.eq.s32.totalorder %s24, 1
      %p105 = por %p103, %p104
      %p106 = scmp.ne.s32.totalorder %s97, %s98
      %p107 = scmp.eq.s32.totalorder %s24, 0
      %p108 = por %p106, %p107
      %p109 = scmp.ne.s32.totalorder %s97, %s98
      %p110 = scmp.eq.s32.totalorder %s25, 1
      %p111 = por %p109, %p110
      %p113 = scmp.ne.s32.totalorder %s98, %s112
      %p114 = scmp.eq.s32.totalorder %s25, 0
      %p115 = por %p113, %p114
      %s117 = sadd.s32 %s116, 1
      %p120 = scmp.eq.s32.totalorder %s19, 1
      %p121 = scmp.ne.s32.totalorder %s116, %s118
      %p122 = scmp.eq.s32.totalorder %s19, 0
      %p123 = por %p121, %p122
      %p124 = scmp.ne.s32.totalorder %s116, %s118
      %p125 = scmp.eq.s32.totalorder %s24, 1
      %p126 = por %p124, %p125
      %p127 = scmp.ne.s32.totalorder %s118, %s119
      %p128 = scmp.eq.s32.totalorder %s24, 0
      %p129 = por %p127, %p128
      %p130 = scmp.ne.s32.totalorder %s118, %s119
      %p131 = scmp.eq.s32.totalorder %s25, 1
      %p132 = por %p130, %p131
      %p134 = scmp.ne.s32.totalorder %s119, %s133
      %p135 = scmp.eq.s32.totalorder %s25, 0
      %p136 = por %p134, %p135
      %s137 = ssub.s32 %s19, %s26
      %p138 = scmp.eq.s32.totalorder %s137, 0
      %s140 = sadd.s32 %s139, 1
      %s141 = scalar_select %p138, %s139, %s140
      %p144 = pneg %p138
      %p145 = scmp.eq.s32.totalorder %s19, 1
      %p146 = por %p144, %p145
      %p147 = scmp.ne.s32.totalorder %s139, %s142
      %p148 = scmp.eq.s32.totalorder %s19, 0
      %p149 = por %p147, %p148
      %p150 = scmp.ne.s32.totalorder %s139, %s142
      %p151 = scmp.eq.s32.totalorder %s24, 1
      %p152 = por %p150, %p151
      %p153 = scmp.ne.s32.totalorder %s142, %s143
      %p154 = scmp.eq.s32.totalorder %s24, 0
      %p155 = por %p153, %p154
      %p156 = scmp.ne.s32.totalorder %s142, %s143
      %p157 = scmp.eq.s32.totalorder %s25, 1
      %p158 = por %p156, %p157
      %p160 = scmp.ne.s32.totalorder %s143, %s159
      %p161 = scmp.eq.s32.totalorder %s25, 0
      %p162 = por %p160, %p161
      %p163 = scmp.le.s32.totalorder 1, %s19
      %p164 = scmp.lt.s32.totalorder %s19, 3
      %p165 = pnand %p163, %p164
      %p166 = pneg %p165
      // Predicated region
      $region9: #{tpu_custom_call.1} parent=5 // pred_check
        _
      $region10: #{tpu_custom_call.1} parent=5 // pred_check_branch
        %168 = sbr.rel (%p165) target = $region12
      $region11: #{tpu_custom_call.1} parent=5 // pred_region
        %s169 = ssub.s32 %s19, 1
        // Predicated region
        $region13: #{tpu_custom_call.1} parent=11 // pred_check
          %p170 = pneg %p66
        $region14: #{tpu_custom_call.1} parent=11 // pred_check_branch
          %172 = sbr.rel (%p170) target = $region16
        $region15: #{tpu_custom_call.1} parent=11 // pred_region
          %174 = vsyncadd [#allocation6], 0
          %s175 = sshll.u32 %s1, 4
          %s176 = int_to_ptr.hbm [resolvable:$true] %s175
          %s177 = sshll.u32 [#allocation5], 4
          %s178 = int_to_ptr.vmem [resolvable:$true] %s177
          %183 = dma.hbm_to_vmem [thread:$0]  %s176, 4096, %s178, [#allocation6], 128, 128, 8
        $region16: #{tpu_custom_call.1} parent=11 // pred_fallthru
          _
        // Predicated region
        $region17: #{tpu_custom_call.1} parent=11 // pred_check
          %p184 = pneg %p87
        $region18: #{tpu_custom_call.1} parent=11 // pred_check_branch
          %186 = sbr.rel (%p184) target = $region20
        $region19: #{tpu_custom_call.1} parent=11 // pred_region
          %188 = vsyncadd [#allocation6], 0
          %s190 = sshll.u32 %s2, 4
          %s191 = int_to_ptr.hbm [resolvable:$true] %s190
          %s192 = sshll.u32 [#allocation7], 4
          %s193 = int_to_ptr.vmem [resolvable:$true] %s192
          %195 = dma.hbm_to_vmem [thread:$0]  %s191, 32, %s193, [#allocation6]
        $region20: #{tpu_custom_call.1} parent=11 // pred_fallthru
          _
        // Predicated region
        $region21: #{tpu_custom_call.1} parent=11 // pred_check
          %p196 = pneg %p108
        $region22: #{tpu_custom_call.1} parent=11 // pred_check_branch
          %198 = sbr.rel (%p196) target = $region24
        $region23: #{tpu_custom_call.1} parent=11 // pred_region
          %200 = vsyncadd [#allocation9], 0
          %s201 = sshll.u32 %s3, 4
          %s202 = int_to_ptr.hbm [resolvable:$true] %s201
          %s203 = sshll.u32 [#allocation8], 4
          %s204 = int_to_ptr.vmem [resolvable:$true] %s203
          %209 = dma.hbm_to_vmem [thread:$0]  %s202, 2048, %s204, [#allocation9], 64, 64, 4
        $region24: #{tpu_custom_call.1} parent=11 // pred_fallthru
          _
        // Predicated region
        $region25: #{tpu_custom_call.1} parent=11 // pred_check
          %p210 = pneg %p129
        $region26: #{tpu_custom_call.1} parent=11 // pred_check_branch
          %212 = sbr.rel (%p210) target = $region28
        $region27: #{tpu_custom_call.1} parent=11 // pred_region
          _
        $region28: #{tpu_custom_call.1} parent=11 // pred_fallthru
          _
      $region12: #{tpu_custom_call.1} parent=5 // pred_fallthru
        _
      %p213 = scmp.lt.s32.totalorder %s19, 2
      // Predicated region
      $region29: #{tpu_custom_call.1} parent=5 // pred_check
        %p214 = pneg %p213
      $region30: #{tpu_custom_call.1} parent=5 // pred_check_branch
        %216 = sbr.rel (%p214) target = $region32
      $region31: #{tpu_custom_call.1} parent=5 // pred_region
        // Predicated region
        $region33: #{tpu_custom_call.1} parent=31 // pred_check
          %p217 = pneg %p39
        $region34: #{tpu_custom_call.1} parent=31 // pred_check_branch
          %219 = sbr.rel (%p217) target = $region36
        $region35: #{tpu_custom_call.1} parent=31 // pred_region
          %s220 = sand.u32 %s29, 1
          %s221 = scalar_lea.sflag [#allocation3], %s220
          %s222 = sand.u32 %s29, 1
          %s223 = smul.addr %s222, 12
          %s224 = scalar_lea.vmem [#allocation2], %s223
          %s225 = smul.u32 3, %s19
          %227 = vsyncadd %s221, 0
          %s228 = smul.addr %s225, 4
          %s229 = scalar_lea.hbm %s0, %s228
          %s230 = sshll.u32 %s229, 4
          %s231 = int_to_ptr.hbm [resolvable:$true] %s230
          %s232 = sshll.u32 %s224, 4
          %s233 = int_to_ptr.vmem [resolvable:$true] %s232
          %238 = dma.hbm_to_vmem [thread:$0]  %s231, 192, %s233, %s221, 64, 64, 4
        $region36: #{tpu_custom_call.1} parent=31 // pred_fallthru
          _
      $region32: #{tpu_custom_call.1} parent=5 // pred_fallthru
        _
      %p239 = scmp.le.s32.totalorder 1, %s19
      %p240 = scmp.lt.s32.totalorder %s19, 3
      %p241 = pnand %p239, %p240
      %p242 = pneg %p241
      // Predicated region
      $region37: #{tpu_custom_call.1} parent=5 // pred_check
        _
      $region38: #{tpu_custom_call.1} parent=5 // pred_check_branch
        %244 = sbr.rel (%p241) target = $region40
      $region39: #{tpu_custom_call.1} parent=5 // pred_region
        %s245 = ssub.s32 %s19, 1
        %s246 = sand.u32 %s32, 1
        %s247 = scalar_lea.sflag [#allocation3], %s246
        %s248 = sand.u32 %s32, 1
        %s249 = smul.addr %s248, 12
        %s250 = scalar_lea.vmem [#allocation2], %s249
        // Predicated region
        $region41: #{tpu_custom_call.1} parent=39 // pred_check
          %p251 = pneg %p45
        $region42: #{tpu_custom_call.1} parent=39 // pred_check_branch
          %253 = sbr.rel (%p251) target = $region44
        $region43: #{tpu_custom_call.1} parent=39 // pred_region
          %255 = dma.done %s247, 192
        $region44: #{tpu_custom_call.1} parent=39 // pred_fallthru
          _
        // Predicated region
        $region45: #{tpu_custom_call.1} parent=39 // pred_check
          %p256 = pneg %p66
        $region46: #{tpu_custom_call.1} parent=39 // pred_check_branch
          %258 = sbr.rel (%p256) target = $region48
        $region47: #{tpu_custom_call.1} parent=39 // pred_region
          %260 = dma.done [#allocation6], 4096
        $region48: #{tpu_custom_call.1} parent=39 // pred_fallthru
          _
        // Predicated region
        $region49: #{tpu_custom_call.1} parent=39 // pred_check
          %p261 = pneg %p87
        $region50: #{tpu_custom_call.1} parent=39 // pred_check_branch
          %263 = sbr.rel (%p261) target = $region52
        $region51: #{tpu_custom_call.1} parent=39 // pred_region
          %265 = dma.done [#allocation6], 32
        $region52: #{tpu_custom_call.1} parent=39 // pred_fallthru
          _
        // Predicated region
        $region53: #{tpu_custom_call.1} parent=39 // pred_check
          %p266 = pneg %p108
        $region54: #{tpu_custom_call.1} parent=39 // pred_check_branch
          %268 = sbr.rel (%p266) target = $region56
        $region55: #{tpu_custom_call.1} parent=39 // pred_region
          %270 = dma.done [#allocation9], 2048
        $region56: #{tpu_custom_call.1} parent=39 // pred_fallthru
          _
        %s271 = sand.u32 %s32, 1
        %s272 = scalar_lea.sflag [#allocation3], %s271
        %s273 = sand.u32 %s32, 1
        %s274 = smul.addr %s273, 12
        %s275 = scalar_lea.vmem [#allocation2], %s274
        %p276 = pneg %p45
        %p277 = pneg %p42
        %p278 = pneg %p66
        %p279 = pneg %p63
        %p280 = pneg %p87
        %p281 = pneg %p84
        %p282 = pneg %p108
        %p283 = pneg %p105
        %p284 = pneg %p129
        %p285 = pneg %p126
        %p286 = pneg %p155
        %p287 = pneg %p152
        %s288 = sand.u32 %s142, 1
        %s289 = scalar_lea.sflag [#allocation4], %s288
        %s290 = sand.u32 %s142, 1
        %s291 = smul.addr %s290, 8
        %s292 = scalar_lea.vmem [#allocation10], %s291
        %s293 = smul.u32 3, %s24
        %v294 = vld [vmem:[%s250] sm:$0xf]
        %v295 = vld [vmem:[%s250 + $0x4] sm:$0xf]
        %v296 = vld [vmem:[%s250 + $0x8] sm:$0xf]
        %v300 = vunpack.c.l.b16 %v294
        %v301 = vunpack.c.l.b16 %v295
        %v302 = vunpack.c.l.b16 %v296
        %v303 = vpack.c.b16 %v301, %v300
        %v304 = vpack.c.b16 %v302, %v302
        %vm307 = vsmask.f32 6400
        %v309 = vshrl.u32 %v303, 16
        %v311 = vrot.slane %v309, 1
        %v312 = vshll.u32 %v303, 16
        %v314 = vrot.slane %v312, 2
        %v315 = vor.u32 %v311, %v314
        %v317 = vshrl.u32 %v304, 16
        %v319 = vrot.slane %v317, 1
        %v320 = vshll.u32 %v304, 16
        %v322 = vrot.slane %v320, 2
        %v323 = vor.u32 %v319, %v322
        %v324 = vsel %vm307, %v315, %v323
        %v327 = vld [vmem:[#allocation5] sm:$0xff]
        %v328 = vld [vmem:[#allocation5 + $0x8] sm:$0xff]
        %v329 = vld [vmem:[#allocation5 + $0x10] sm:$0xff]
        %v330 = vld [vmem:[#allocation5 + $0x18] sm:$0xff]
        %v331 = vld [vmem:[#allocation5 + $0x20] sm:$0xff]
        %v332 = vld [vmem:[#allocation5 + $0x28] sm:$0xff]
        %v333 = vld [vmem:[#allocation5 + $0x30] sm:$0xff]
        %v334 = vld [vmem:[#allocation5 + $0x38] sm:$0xff]
        %v335 = vld [vmem:[#allocation5 + $0x40] sm:$0xff]
        %v336 = vld [vmem:[#allocation5 + $0x48] sm:$0xff]
        %v337 = vld [vmem:[#allocation5 + $0x50] sm:$0xff]
        %v338 = vld [vmem:[#allocation5 + $0x58] sm:$0xff]
        %v339 = vld [vmem:[#allocation5 + $0x60] sm:$0xff]
        %v340 = vld [vmem:[#allocation5 + $0x68] sm:$0xff]
        %v341 = vld [vmem:[#allocation5 + $0x70] sm:$0xff]
        %v342 = vld [vmem:[#allocation5 + $0x78] sm:$0xff]
        %v343 = vld [vmem:[#allocation5 + $0x80] sm:$0xff]
        %v344 = vld [vmem:[#allocation5 + $0x88] sm:$0xff]
        %v345 = vld [vmem:[#allocation5 + $0x90] sm:$0xff]
        %v346 = vld [vmem:[#allocation5 + $0x98] sm:$0xff]
        %v347 = vld [vmem:[#allocation5 + $0xa0] sm:$0xff]
        %v348 = vld [vmem:[#allocation5 + $0xa8] sm:$0xff]
        %v349 = vld [vmem:[#allocation5 + $0xb0] sm:$0xff]
        %v350 = vld [vmem:[#allocation5 + $0xb8] sm:$0xff]
        %v351 = vld [vmem:[#allocation5 + $0xc0] sm:$0xff]
        %v352 = vld [vmem:[#allocation5 + $0xc8] sm:$0xff]
        %v353 = vld [vmem:[#allocation5 + $0xd0] sm:$0xff]
        %v354 = vld [vmem:[#allocation5 + $0xd8] sm:$0xff]
        %v355 = vld [vmem:[#allocation5 + $0xe0] sm:$0xff]
        %v356 = vld [vmem:[#allocation5 + $0xe8] sm:$0xff]
        %v357 = vld [vmem:[#allocation5 + $0xf0] sm:$0xff]
        %v358 = vld [vmem:[#allocation5 + $0xf8] sm:$0xff]
        %v359 = vld [vmem:[#allocation7] sm:$0x3]
        %v361 = vperm.slane %v359, 0
        %v362 = vperm.slane %v359, 1
        %v397 = vunpack.c.l.b16 %v327
        %v398 = vunpack.c.h.b16 %v327
        %v399 = vunpack.c.l.b16 %v328
        %v400 = vunpack.c.h.b16 %v328
        %v401 = vunpack.c.l.b16 %v329
        %v402 = vunpack.c.h.b16 %v329
        %v403 = vunpack.c.l.b16 %v330
        %v404 = vunpack.c.h.b16 %v330
        %v405 = vunpack.c.l.b16 %v331
        %v406 = vunpack.c.h.b16 %v331
        %v407 = vunpack.c.l.b16 %v332
        %v408 = vunpack.c.h.b16 %v332
        %v409 = vunpack.c.l.b16 %v333
        %v410 = vunpack.c.h.b16 %v333
        %v411 = vunpack.c.l.b16 %v334
        %v412 = vunpack.c.h.b16 %v334
        %v413 = vunpack.c.l.b16 %v335
        %v414 = vunpack.c.h.b16 %v335
        %v415 = vunpack.c.l.b16 %v336
        %v416 = vunpack.c.h.b16 %v336
        %v417 = vunpack.c.l.b16 %v337
        %v418 = vunpack.c.h.b16 %v337
        %v419 = vunpack.c.l.b16 %v338
        %v420 = vunpack.c.h.b16 %v338
        %v421 = vunpack.c.l.b16 %v339
        %v422 = vunpack.c.h.b16 %v339
        %v423 = vunpack.c.l.b16 %v340
        %v424 = vunpack.c.h.b16 %v340
        %v425 = vunpack.c.l.b16 %v341
        %v426 = vunpack.c.h.b16 %v341
        %v427 = vunpack.c.l.b16 %v342
        %v428 = vunpack.c.h.b16 %v342
        %v429 = vunpack.c.l.b16 %v343
        %v430 = vunpack.c.h.b16 %v343
        %v431 = vunpack.c.l.b16 %v344
        %v432 = vunpack.c.h.b16 %v344
        %v433 = vunpack.c.l.b16 %v345
        %v434 = vunpack.c.h.b16 %v345
        %v435 = vunpack.c.l.b16 %v346
        %v436 = vunpack.c.h.b16 %v346
        %v437 = vunpack.c.l.b16 %v347
        %v438 = vunpack.c.h.b16 %v347
        %v439 = vunpack.c.l.b16 %v348
        %v440 = vunpack.c.h.b16 %v348
        %v441 = vunpack.c.l.b16 %v349
        %v442 = vunpack.c.h.b16 %v349
        %v443 = vunpack.c.l.b16 %v350
        %v444 = vunpack.c.h.b16 %v350
        %v445 = vunpack.c.l.b16 %v351
        %v446 = vunpack.c.h.b16 %v351
        %v447 = vunpack.c.l.b16 %v352
        %v448 = vunpack.c.h.b16 %v352
        %v449 = vunpack.c.l.b16 %v353
        %v450 = vunpack.c.h.b16 %v353
        %v451 = vunpack.c.l.b16 %v354
        %v452 = vunpack.c.h.b16 %v354
        %v453 = vunpack.c.l.b16 %v355
        %v454 = vunpack.c.h.b16 %v355
        %v455 = vunpack.c.l.b16 %v356
        %v456 = vunpack.c.h.b16 %v356
        %v457 = vunpack.c.l.b16 %v357
        %v458 = vunpack.c.h.b16 %v357
        %v459 = vunpack.c.l.b16 %v358
        %v460 = vunpack.c.h.b16 %v358
        %v461 = vpack.c.b16 %v399, %v397
        %v462 = vpack.c.b16 %v400, %v398
        %v463 = vpack.c.b16 %v403, %v401
        %v464 = vpack.c.b16 %v404, %v402
        %v465 = vpack.c.b16 %v407, %v405
        %v466 = vpack.c.b16 %v408, %v406
        %v467 = vpack.c.b16 %v411, %v409
        %v468 = vpack.c.b16 %v412, %v410
        %v469 = vpack.c.b16 %v415, %v413
        %v470 = vpack.c.b16 %v416, %v414
        %v471 = vpack.c.b16 %v419, %v417
        %v472 = vpack.c.b16 %v420, %v418
        %v473 = vpack.c.b16 %v423, %v421
        %v474 = vpack.c.b16 %v424, %v422
        %v475 = vpack.c.b16 %v427, %v425
        %v476 = vpack.c.b16 %v428, %v426
        %v477 = vpack.c.b16 %v431, %v429
        %v478 = vpack.c.b16 %v432, %v430
        %v479 = vpack.c.b16 %v435, %v433
        %v480 = vpack.c.b16 %v436, %v434
        %v481 = vpack.c.b16 %v439, %v437
        %v482 = vpack.c.b16 %v440, %v438
        %v483 = vpack.c.b16 %v443, %v441
        %v484 = vpack.c.b16 %v444, %v442
        %v485 = vpack.c.b16 %v447, %v445
        %v486 = vpack.c.b16 %v448, %v446
        %v487 = vpack.c.b16 %v451, %v449
        %v488 = vpack.c.b16 %v452, %v450
        %v489 = vpack.c.b16 %v455, %v453
        %v490 = vpack.c.b16 %v456, %v454
        %v491 = vpack.c.b16 %v459, %v457
        %v492 = vpack.c.b16 %v460, %v458
        %525 = vmatpush.bf16.msra.mxu0 %v475
        %526 = vmatpush.bf16.msra.mxu0 %v473
        %527 = vmatpush.bf16.msra.mxu0 %v471
        %528 = vmatpush.bf16.msra.mxu0 %v469
        %529 = vmatpush.bf16.msra.mxu0 %v467
        %530 = vmatpush.bf16.msra.mxu0 %v465
        %531 = vmatpush.bf16.msra.mxu0 %v463
        %532 = vmatpush.bf16.msra.mxu0 %v461
        %533 = vmatmul.bf16.gmra.mxu0 %v303
        %v534 = vpop.f32.mrf.mxu0
        %v535 = vadd.f32 %v361, %v534
        %v536 = vpop.f32.mrf.mxu0
        %v537 = vadd.f32 %v361, %v536
        %538 = vmatmul.bf16.gmra.mxu0 %v304
        %v539 = vpop.f32.mrf.mxu0
        %v540 = vadd.f32 %v361, %v539
        %v541 = vpop.f32.mrf.mxu0
        %542 = vdwg.mxu0
        %543 = vmatpush.bf16.msra.mxu0 %v491
        %544 = vmatpush.bf16.msra.mxu0 %v489
        %545 = vmatpush.bf16.msra.mxu0 %v487
        %546 = vmatpush.bf16.msra.mxu0 %v485
        %547 = vmatpush.bf16.msra.mxu0 %v483
        %548 = vmatpush.bf16.msra.mxu0 %v481
        %549 = vmatpush.bf16.msra.mxu0 %v479
        %550 = vmatpush.bf16.msra.mxu0 %v477
        %551 = vmatmul.bf16.gmra.mxu0 %v324
        %v552 = vpop.f32.mrf.mxu0
        %v553 = vadd.f32 %v535, %v552
        %v554 = vpop.f32.mrf.mxu0
        %v555 = vadd.f32 %v537, %v554
        %556 = vmatmul.bf16.gmra.mxu0 %v323
        %v557 = vpop.f32.mrf.mxu0
        %v558 = vadd.f32 %v540, %v557
        %v559 = vpop.f32.mrf.mxu0
        %560 = vdwg.mxu0
        %561 = vmatpush.bf16.msra.mxu0 %v476
        %562 = vmatpush.bf16.msra.mxu0 %v474
        %563 = vmatpush.bf16.msra.mxu0 %v472
        %564 = vmatpush.bf16.msra.mxu0 %v470
        %565 = vmatpush.bf16.msra.mxu0 %v468
        %566 = vmatpush.bf16.msra.mxu0 %v466
        %567 = vmatpush.bf16.msra.mxu0 %v464
        %568 = vmatpush.bf16.msra.mxu0 %v462
        %569 = vmatmul.bf16.gmra.mxu0 %v303
        %v570 = vpop.f32.mrf.mxu0
        %v571 = vadd.f32 %v362, %v570
        %v572 = vpop.f32.mrf.mxu0
        %v573 = vadd.f32 %v362, %v572
        %574 = vmatmul.bf16.gmra.mxu0 %v304
        %v575 = vpop.f32.mrf.mxu0
        %v576 = vadd.f32 %v362, %v575
        %v577 = vpop.f32.mrf.mxu0
        %578 = vdwg.mxu0
        %579 = vmatpush.bf16.msra.mxu0 %v492
        %580 = vmatpush.bf16.msra.mxu0 %v490
        %581 = vmatpush.bf16.msra.mxu0 %v488
        %582 = vmatpush.bf16.msra.mxu0 %v486
        %583 = vmatpush.bf16.msra.mxu0 %v484
        %584 = vmatpush.bf16.msra.mxu0 %v482
        %585 = vmatpush.bf16.msra.mxu0 %v480
        %586 = vmatpush.bf16.msra.mxu0 %v478
        %587 = vmatmul.bf16.gmra.mxu0 %v324
        %v588 = vpop.f32.mrf.mxu0
        %v589 = vadd.f32 %v571, %v588
        %v590 = vpop.f32.mrf.mxu0
        %v591 = vadd.f32 %v573, %v590
        %592 = vmatmul.bf16.gmra.mxu0 %v323
        %v593 = vpop.f32.mrf.mxu0
        %v594 = vadd.f32 %v576, %v593
        %v595 = vpop.f32.mrf.mxu0
        %596 = vdwg.mxu0
        %v597 = vlaneseq
        %v598 = vshrl.u32 %v597, 7
        %v599 = vadd.s32 %v598, 8
        %v600 = vadd.s32 %v598, 16
        %vm601 = vcmp.lt.s32.totalorder %v598, 3
        %vm602 = vcmp.lt.s32.totalorder %v599, 3
        %vm603 = vcmp.lt.s32.totalorder %v600, 3
        %v604 = vmax.f32 %v553, 0.0
        %v605 = vmax.f32 %v555, 0.0
        %v606 = vmax.f32 %v558, 0.0
        %v607 = vsel %vm601, 1, 0
        %v608 = vsel %vm602, 1, 0
        %v609 = vsel %vm603, 1, 0
        %vm610 = vcmp.eq.s32.totalorder %v607, 1
        %vm611 = vcmp.eq.s32.totalorder %v608, 1
        %vm612 = vcmp.eq.s32.totalorder %v609, 1
        %v613 = vsel %vm610, 0.0, %v604
        %v614 = vsel %vm611, 0.0, %v605
        %v615 = vsel %vm612, 0.0, %v606
        %v616 = vpack.c.bf16 %v613, %v613
        %v617 = vpack.c.bf16 %v614, %v614
        %v618 = vpack.c.bf16 %v615, %v615
        %v622 = vunpack.c.l.b16 %v616
        %v623 = vunpack.c.l.b16 %v617
        %v624 = vunpack.c.l.b16 %v618
        %v625 = vpack.c.b16 %v623, %v622
        %v626 = vpack.c.b16 %v624, %v624
        %v630 = vshrl.u32 %v625, 16
        %v632 = vrot.slane %v630, 1
        %v633 = vshll.u32 %v625, 16
        %v635 = vrot.slane %v633, 2
        %v636 = vor.u32 %v632, %v635
        %v638 = vshrl.u32 %v626, 16
        %v640 = vrot.slane %v638, 1
        %v641 = vshll.u32 %v626, 16
        %v643 = vrot.slane %v641, 2
        %v644 = vor.u32 %v640, %v643
        %v645 = vsel %vm307, %v636, %v644
        %v648 = vld [vmem:[#allocation8] sm:$0xf]
        %v649 = vld [vmem:[#allocation8 + $0x4] sm:$0xf]
        %v650 = vld [vmem:[#allocation8 + $0x8] sm:$0xf]
        %v651 = vld [vmem:[#allocation8 + $0xc] sm:$0xf]
        %v652 = vld [vmem:[#allocation8 + $0x10] sm:$0xf]
        %v653 = vld [vmem:[#allocation8 + $0x14] sm:$0xf]
        %v654 = vld [vmem:[#allocation8 + $0x18] sm:$0xf]
        %v655 = vld [vmem:[#allocation8 + $0x1c] sm:$0xf]
        %v656 = vld [vmem:[#allocation8 + $0x20] sm:$0xf]
        %v657 = vld [vmem:[#allocation8 + $0x24] sm:$0xf]
        %v658 = vld [vmem:[#allocation8 + $0x28] sm:$0xf]
        %v659 = vld [vmem:[#allocation8 + $0x2c] sm:$0xf]
        %v660 = vld [vmem:[#allocation8 + $0x30] sm:$0xf]
        %v661 = vld [vmem:[#allocation8 + $0x34] sm:$0xf]
        %v662 = vld [vmem:[#allocation8 + $0x38] sm:$0xf]
        %v663 = vld [vmem:[#allocation8 + $0x3c] sm:$0xf]
        %v664 = vld [vmem:[#allocation8 + $0x40] sm:$0xf]
        %v665 = vld [vmem:[#allocation8 + $0x44] sm:$0xf]
        %v666 = vld [vmem:[#allocation8 + $0x48] sm:$0xf]
        %v667 = vld [vmem:[#allocation8 + $0x4c] sm:$0xf]
        %v668 = vld [vmem:[#allocation8 + $0x50] sm:$0xf]
        %v669 = vld [vmem:[#allocation8 + $0x54] sm:$0xf]
        %v670 = vld [vmem:[#allocation8 + $0x58] sm:$0xf]
        %v671 = vld [vmem:[#allocation8 + $0x5c] sm:$0xf]
        %v672 = vld [vmem:[#allocation8 + $0x60] sm:$0xf]
        %v673 = vld [vmem:[#allocation8 + $0x64] sm:$0xf]
        %v674 = vld [vmem:[#allocation8 + $0x68] sm:$0xf]
        %v675 = vld [vmem:[#allocation8 + $0x6c] sm:$0xf]
        %v676 = vld [vmem:[#allocation8 + $0x70] sm:$0xf]
        %v677 = vld [vmem:[#allocation8 + $0x74] sm:$0xf]
        %v678 = vld [vmem:[#allocation8 + $0x78] sm:$0xf]
        %v679 = vld [vmem:[#allocation8 + $0x7c] sm:$0xf]
        %v680 = vld [vmem:[%s4] sm:$0x1]
        %v682 = vperm.slane %v680, 0
        %v716 = vunpack.c.l.b16 %v648
        %v717 = vunpack.c.l.b16 %v649
        %v718 = vunpack.c.l.b16 %v650
        %v719 = vunpack.c.l.b16 %v651
        %v720 = vunpack.c.l.b16 %v652
        %v721 = vunpack.c.l.b16 %v653
        %v722 = vunpack.c.l.b16 %v654
        %v723 = vunpack.c.l.b16 %v655
        %v724 = vunpack.c.l.b16 %v656
        %v725 = vunpack.c.l.b16 %v657
        %v726 = vunpack.c.l.b16 %v658
        %v727 = vunpack.c.l.b16 %v659
        %v728 = vunpack.c.l.b16 %v660
        %v729 = vunpack.c.l.b16 %v661
        %v730 = vunpack.c.l.b16 %v662
        %v731 = vunpack.c.l.b16 %v663
        %v732 = vunpack.c.l.b16 %v664
        %v733 = vunpack.c.l.b16 %v665
        %v734 = vunpack.c.l.b16 %v666
        %v735 = vunpack.c.l.b16 %v667
        %v736 = vunpack.c.l.b16 %v668
        %v737 = vunpack.c.l.b16 %v669
        %v738 = vunpack.c.l.b16 %v670
        %v739 = vunpack.c.l.b16 %v671
        %v740 = vunpack.c.l.b16 %v672
        %v741 = vunpack.c.l.b16 %v673
        %v742 = vunpack.c.l.b16 %v674
        %v743 = vunpack.c.l.b16 %v675
        %v744 = vunpack.c.l.b16 %v676
        %v745 = vunpack.c.l.b16 %v677
        %v746 = vunpack.c.l.b16 %v678
        %v747 = vunpack.c.l.b16 %v679
        %v748 = vpack.c.b16 %v717, %v716
        %v749 = vpack.c.b16 %v719, %v718
        %v750 = vpack.c.b16 %v721, %v720
        %v751 = vpack.c.b16 %v723, %v722
        %v752 = vpack.c.b16 %v725, %v724
        %v753 = vpack.c.b16 %v727, %v726
        %v754 = vpack.c.b16 %v729, %v728
        %v755 = vpack.c.b16 %v731, %v730
        %v756 = vpack.c.b16 %v733, %v732
        %v757 = vpack.c.b16 %v735, %v734
        %v758 = vpack.c.b16 %v737, %v736
        %v759 = vpack.c.b16 %v739, %v738
        %v760 = vpack.c.b16 %v741, %v740
        %v761 = vpack.c.b16 %v743, %v742
        %v762 = vpack.c.b16 %v745, %v744
        %v763 = vpack.c.b16 %v747, %v746
        %780 = vmatpush.bf16.msra.mxu0 %v755
        %781 = vmatpush.bf16.msra.mxu0 %v754
        %782 = vmatpush.bf16.msra.mxu0 %v753
        %783 = vmatpush.bf16.msra.mxu0 %v752
        %784 = vmatpush.bf16.msra.mxu0 %v751
        %785 = vmatpush.bf16.msra.mxu0 %v750
        %786 = vmatpush.bf16.msra.mxu0 %v749
        %787 = vmatpush.bf16.msra.mxu0 %v748
        %788 = vmatmul.bf16.gmra.mxu0 %v625
        %v789 = vpop.f32.mrf.mxu0
        %v790 = vadd.f32 %v682, %v789
        %v791 = vpop.f32.mrf.mxu0
        %v792 = vadd.f32 %v682, %v791
        %793 = vmatmul.bf16.gmra.mxu0 %v626
        %v794 = vpop.f32.mrf.mxu0
        %v795 = vpop.f32.mrf.mxu0
        %796 = vdwg.mxu0
        %797 = vmatpush.bf16.msra.mxu0 %v763
        %798 = vmatpush.bf16.msra.mxu0 %v762
        %799 = vmatpush.bf16.msra.mxu0 %v761
        %800 = vmatpush.bf16.msra.mxu0 %v760
        %801 = vmatpush.bf16.msra.mxu0 %v759
        %802 = vmatpush.bf16.msra.mxu0 %v758
        %803 = vmatpush.bf16.msra.mxu0 %v757
        %804 = vmatpush.bf16.msra.mxu0 %v756
        %805 = vmatmul.bf16.gmra.mxu0 %v645
        %v806 = vpop.f32.mrf.mxu0
        %v807 = vadd.f32 %v790, %v806
        %v808 = vpop.f32.mrf.mxu0
        %v809 = vadd.f32 %v792, %v808
        %810 = vmatmul.bf16.gmra.mxu0 %v644
        %v811 = vpop.f32.mrf.mxu0
        %v812 = vpop.f32.mrf.mxu0
        %813 = vdwg.mxu0
        %v814 = vmax.f32 %v807, 0.0
        %v815 = vmax.f32 %v809, 0.0
        %vm819 = vcmask 1044480
        %v820 = vrot.slane %v589, 3
        %v821 = vrot.slane %v591, 3
        %v822 = vsel %vm819, %v820, %v821
        %v823 = vrot.slane %v594, 3
        %v824 = vsel %vm819, %v821, %v823
        %v827 = vadd.f32 %v814, %v822
        %v828 = vadd.f32 %v815, %v824
        %v829 = vmax.f32 %v827, 0.0
        %v830 = vmax.f32 %v828, 0.0
        %v831 = vpack.c.bf16 %v829, %v829
        %v832 = vpack.c.bf16 %v830, %v830
        %833 = vst [vmem:[%s292] sm:$0xf] %v831
        %834 = vst [vmem:[%s292 + $0x4] sm:$0xf] %v832
        %s835 = sand.u32 %s142, 1
        %s836 = scalar_lea.sflag [#allocation4], %s835
        %s837 = sand.u32 %s142, 1
        %s838 = smul.addr %s837, 8
        %s839 = scalar_lea.vmem [#allocation10], %s838
        // Predicated region
        $region57: #{tpu_custom_call.1} parent=39 // pred_check
          %p840 = pneg %p152
        $region58: #{tpu_custom_call.1} parent=39 // pred_check_branch
          %842 = sbr.rel (%p840) target = $region60
        $region59: #{tpu_custom_call.1} parent=39 // pred_region
          %844 = vsyncadd %s836, 0
          %s845 = smul.addr %s24, 2
          %s846 = smul.addr %s845, 4
          %s847 = scalar_lea.hbm %s5, %s846
          %s848 = sshll.u32 %s839, 4
          %s849 = int_to_ptr.vmem [resolvable:$true] %s848
          %s850 = sshll.u32 %s847, 4
          %s851 = int_to_ptr.hbm [resolvable:$true] %s850
          %856 = dma.vmem_to_hbm [thread:$0]  %s849, 128, %s851, %s836, 64, 64, 4
        $region60: #{tpu_custom_call.1} parent=39 // pred_fallthru
          _
      $region40: #{tpu_custom_call.1} parent=5 // pred_fallthru
        _
      %p857 = scmp.le.s32.totalorder 2, %s19
      // Predicated region
      $region61: #{tpu_custom_call.1} parent=5 // pred_check
        %p858 = pneg %p857
      $region62: #{tpu_custom_call.1} parent=5 // pred_check_branch
        %860 = sbr.rel (%p858) target = $region64
      $region63: #{tpu_custom_call.1} parent=5 // pred_region
        %s861 = ssub.s32 %s19, 2
        // Predicated region
        $region65: #{tpu_custom_call.1} parent=63 // pred_check
          %p862 = pneg %p158
        $region66: #{tpu_custom_call.1} parent=63 // pred_check_branch
          %864 = sbr.rel (%p862) target = $region68
        $region67: #{tpu_custom_call.1} parent=63 // pred_region
          %s865 = sand.u32 %s143, 1
          %s866 = scalar_lea.sflag [#allocation4], %s865
          %s867 = sand.u32 %s143, 1
          %s868 = smul.addr %s867, 8
          %s869 = scalar_lea.vmem [#allocation10], %s868
          %871 = dma.done %s866, 128
        $region68: #{tpu_custom_call.1} parent=63 // pred_fallthru
          _
      $region64: #{tpu_custom_call.1} parent=5 // pred_fallthru
        _
    $region6: #{tpu_custom_call.1} parent=1 // loop_footer
      %s23 = sadd.s32 1, %s19
    $region7: #{tpu_custom_call.1} parent=1 // loop_footer_branch
      %18 = sbr.rel target = $region3
    $region8: #{tpu_custom_call.1} parent=1 // loop_exit
      _
    %872 = vsyncpa [#allocation3], 1
    %s873 = scalar_lea.sflag [#allocation3], 1
    %874 = vsyncpa %s873, 1
    %875 = vsyncpa [#allocation6], 1
    %876 = vsyncpa [#allocation9], 1
    %877 = vsyncpa [#allocation4], 1
    %s878 = scalar_lea.sflag [#allocation4], 1
    %879 = vsyncpa %s878, 1

</llo_original>
